<compile_context>
chip_gen: v7x
topology: tpu7x:2x2x1
jax: 0.10.0
libtpu: 0.0.40
codegen_flags: <defaults>
</compile_context>

<pallas_src>
import math

import jax
import jax.numpy as jnp
from jax.experimental import pallas as pl
from jax.experimental.pallas import tpu as pltpu


def _prelu_kernel(x_ref, w_ref, o_ref):
    # x_ref: (TM, TN) row tile; w_ref: (1, TN) per-channel weights (broadcast).
    x = x_ref[...]
    w = w_ref[...]
    o_ref[...] = jnp.where(x >= 0, x, x * w)


def _device_hints():
    """Per-generation tiling hints; safe defaults if detection fails."""
    target_block_bytes = 4 * 1024 * 1024      # near roofline on v5e/v6e
    vmem_limit_bytes = 32 * 1024 * 1024       # v5e scoped default is 16 MiB
    try:
        kind = jax.devices()[0].device_kind.lower()
        if "v7" in kind:
            # v7x: ~3.2 TB/s HBM -> bigger blocks amortize the ~0.35 us
            # per-grid-step cost; 2 x 8 MiB blocks double-buffered ~= 32 MiB,
            # well inside the 64 MiB physical VMEM.
            target_block_bytes = 8 * 1024 * 1024
            vmem_limit_bytes = 48 * 1024 * 1024
    except Exception:
        pass
    return target_block_bytes, vmem_limit_bytes


def prelu(x: jax.Array, weight: jax.Array) -> jax.Array:
    """Per-feature PReLU over the last dim of x ([B, S, E]); weight has shape [E]."""
    B, S, E = x.shape
    N = B * S
    itemsize = jnp.dtype(x.dtype).itemsize
    target_block_bytes, vmem_limit_bytes = _device_hints()

    # ---- lane packing via lcm(E, 128): pack k rows into one lane-dense row.
    k = 1
    if E % 128 != 0:
        lcm = (E * 128) // math.gcd(E, 128)
        if lcm <= 1024:  # keep the packing factor (and padding cost) modest
            k = lcm // E
    Ew = k * E

    # Pad the row count up to a multiple of k (< k extra rows of HBM traffic)
    # instead of falling back to narrow masked stores.
    pad = (-N) % k
    x_flat = x.reshape(N, E)
    if pad:
        x_flat = jnp.concatenate(
            [x_flat, jnp.zeros((pad, E), dtype=x.dtype)], axis=0
        )
    Np = N + pad
    N2 = Np // k
    x2 = x_flat.reshape(N2, Ew)

    # k-fold tiled weight keeps per-feature alignment: each E-wide lane segment
    # of a packed row is exactly one original row's feature vector.
    w2 = jnp.tile(weight.astype(x.dtype), k).reshape(1, Ew)

    # ---- column tiling (robustness for very wide E): keep one block inside
    # the budget even when a single sublane-height row slab would blow VMEM.
    sublane = {4: 8, 2: 16, 1: 32}.get(itemsize, 8)
    max_tn = max(128, ((target_block_bytes // (sublane * itemsize)) // 128) * 128)
    tn = max_tn if Ew > max_tn else Ew
    grid_n = pl.cdiv(Ew, tn)

    # ---- row-tile size: ~target_block_bytes per block, multiple of the
    # sublane packing for the dtype.
    tm = max(sublane, target_block_bytes // (tn * itemsize))
    tm = max(sublane, (tm // sublane) * sublane)
    if tm >= N2:
        if N2 >= 2 * sublane:
            # Guarantee >= 2 grid steps so the "parallel" axis can be sharded
            # across both v7x TensorCores (harmless on v5e/v6e).
            tm = ((pl.cdiv(N2, 2) + sublane - 1) // sublane) * sublane
        else:
            tm = N2  # full extent is always a legal block shape
    grid_m = pl.cdiv(N2, tm)

    cost = pl.CostEstimate(
        flops=2 * N * E,  # compare + multiply per element
        transcendentals=0,
        bytes_accessed=2 * Np * E * itemsize + Ew * itemsize,
    )

    out2 = pl.pallas_call(
        _prelu_kernel,
        out_shape=jax.ShapeDtypeStruct((N2, Ew), x.dtype),
        grid_spec=pltpu.PrefetchScalarGridSpec(
            num_scalar_prefetch=0,
            grid=(grid_m, grid_n),
            in_specs=[
                pl.BlockSpec((tm, tn), lambda i, j: (i, j)),
                # Row-constant index: with grid_n == 1 (the common case) the
                # weight tile stays resident in VMEM across every grid step.
                pl.BlockSpec((1, tn), lambda i, j: (0, j)),
            ],
            out_specs=pl.BlockSpec((tm, tn), lambda i, j: (i, j)),
        ),
        compiler_params=pltpu.CompilerParams(
            dimension_semantics=("parallel", "parallel"),
            vmem_limit_bytes=vmem_limit_bytes,
        ),
        cost_estimate=cost,
    )(x2, w2)

    out = out2.reshape(Np, E)
    if pad:
        out = out[:N]
    return out.reshape(B, S, E)


def _ref(x, w):
    return jnp.where(x >= 0, x, x * w[None, None, :])


if __name__ == "__main__":
    key = jax.random.PRNGKey(0)
    k1, k2, k3, k4 = jax.random.split(key, 4)

    # Case 1: E divides 128 -> packed path (k=4, Ew=128).
    B, S, E = 2, 8, 32
    x = jax.random.normal(k1, (B, S, E), dtype=jnp.float32)
    # nn.PReLU(E) initializes to 0.25; add a per-channel perturbation so the
    # per-feature broadcast is actually exercised.
    w = 0.25 + 0.01 * jnp.arange(E, dtype=jnp.float32)
    out = jax.block_until_ready(prelu(x, w))
    assert out.shape == (B, S, E)
    assert jnp.allclose(out, _ref(x, w), atol=1e-6), "mismatch (packed, E=32)"

    # Case 2: E does not divide 128 -> lcm packing (k=8, Ew=384), no padding.
    B2, S2, E2 = 2, 12, 48
    x2 = jax.random.normal(k2, (B2, S2, E2), dtype=jnp.float32)
    w2 = 0.25 + 0.005 * jnp.arange(E2, dtype=jnp.float32)
    out2 = jax.block_until_ready(prelu(x2, w2))
    assert jnp.allclose(out2, _ref(x2, w2), atol=1e-6), "mismatch (lcm pack, E=48)"

    # Case 3: lcm packing with row padding (N=14 not divisible by k=8).
    B3, S3, E3 = 2, 7, 48
    x3 = jax.random.normal(k3, (B3, S3, E3), dtype=jnp.float32)
    w3 = 0.25 + 0.005 * jnp.arange(E3, dtype=jnp.float32)
    out3 = jax.block_until_ready(prelu(x3, w3))
    assert jnp.allclose(out3, _ref(x3, w3), atol=1e-6), "mismatch (padded pack)"

    # Case 4: E already a multiple of 128; row count large enough to exercise
    # the >= 2-grid-step split.
    B4, S4, E4 = 4, 64, 128
    x4 = jax.random.normal(k4, (B4, S4, E4), dtype=jnp.float32)
    w4 = 0.25 + 0.001 * jnp.arange(E4, dtype=jnp.float32)
    out4 = jax.block_until_ready(prelu(x4, w4))
    assert jnp.allclose(out4, _ref(x4, w4), atol=1e-6), "mismatch (E=128, 2-step grid)"

    print("KERNEL_OK")
</pallas_src>

<mosaic_0001>
module attributes {stable_mosaic.version = 11 : i64} {
  func.func @_prelu_kernel(%arg0: i32, %arg1: i32, %arg2: memref<4x128xf32, #tpu.memory_space<vmem>>, %arg3: memref<1x128xf32, #tpu.memory_space<vmem>>, %arg4: memref<4x128xf32, #tpu.memory_space<vmem>>) attributes {dimension_semantics = [#tpu.dimension_semantics<parallel>, #tpu.dimension_semantics<parallel>], iteration_bounds = array<i64: 1, 1>, scalar_prefetch = 0 : i64, scratch_operands = 0 : i64, tpu.core_type = #tpu.core_type<tc>, window_params = [{transform_indices = @transform_0, window_bounds = array<i64: 4, 128>}, {transform_indices = @transform_1, window_bounds = array<i64: 1, 128>}, {transform_indices = @transform_2, window_bounds = array<i64: 4, 128>}]} {
    %c0 = arith.constant 0 : index
    %c0_0 = arith.constant 0 : index
    %0 = vector.load %arg2[%c0, %c0_0] : memref<4x128xf32, #tpu.memory_space<vmem>>, vector<4x128xf32>
    %c0_1 = arith.constant 0 : index
    %c0_2 = arith.constant 0 : index
    %1 = vector.load %arg3[%c0_1, %c0_2] : memref<1x128xf32, #tpu.memory_space<vmem>>, vector<1x128xf32>
    %cst = arith.constant 0.000000e+00 : f32
    %2 = vector.broadcast %cst : f32 to vector<4x128xf32>
    %3 = arith.cmpf oge, %0, %2 : vector<4x128xf32>
    %4 = vector.broadcast %1 : vector<1x128xf32> to vector<4x128xf32>
    %5 = arith.mulf %0, %4 : vector<4x128xf32>
    %6 = arith.select %3, %0, %5 : vector<4x128xi1>, vector<4x128xf32>
    %c0_3 = arith.constant 0 : index
    %c0_4 = arith.constant 0 : index
    %7 = vector.load %arg4[%c0_3, %c0_4] : memref<4x128xf32, #tpu.memory_space<vmem>>, vector<4x128xf32>
    tpu.vector_store %arg4[%c0_3, %c0_4], %6 {strides = array<i32>} : memref<4x128xf32, #tpu.memory_space<vmem>>, vector<4x128xf32>,
    return
  }
  func.func @transform_0(%arg0: i32, %arg1: i32) -> (i32, i32) {
    %c0_i32 = arith.constant 0 : i32
    return %arg0, %arg1 : i32, i32
  }
  func.func @transform_1(%arg0: i32, %arg1: i32) -> (i32, i32) {
    %c0_i32 = arith.constant 0 : i32
    %c0_i32_0 = arith.constant 0 : i32
    return %c0_i32, %arg1 : i32, i32
  }
  func.func @transform_2(%arg0: i32, %arg1: i32) -> (i32, i32) {
    %c0_i32 = arith.constant 0 : i32
    return %arg0, %arg1 : i32, i32
  }
}

</mosaic_0001>

<llo_original>
// kernel: tpu_custom_call.1
$region0: #{tpu_custom_call.1}
  #allocation0 [shape = 'u32[]', space=smem, size = 0x4, offset = 0x4, fixed_abs, tag = 'smem constant byte address 0x4 - core index']
  #allocation1 [shape = 'u32[144,128]{1,0:T(1,128)}', space=vmem, size = 0x12000, scoped, tag = 'internal scratch']
  %s0 = inlined_call_operand.hbm [shape: f32[4,128], index: 0, kind: input, shape index: {}]
  %s1 = inlined_call_operand.vmem [shape: f32[1,128], index: 1, kind: input, shape index: {}]
  %s2 = inlined_call_operand.hbm [shape: f32[4,128], index: 2, kind: output, shape index: {}]
  %s3 = sld [smem:[#allocation0]]
  $region22: #{tpu_custom_call.1} parent=0
    _
  %s5 = ssub.s32 1, %s3
  %s6 = scalar_select 0, %s5, %s3
  $region1: #{tpu_custom_call.1} parent=0
    #allocation2 [shape = 'u8[2048]{0}', space=vmem, size = 0x800, scoped, tag = 'input window, operand 0, single buffered']
    #allocation3 [shape = 's32[1]{0}', space=sflag, size = 0x4, scoped, tag = 'scoped memory for tpu_custom_call.1']
    #allocation4 [shape = 's32[1]{0}', space=sflag, size = 0x4, scoped, tag = 'scoped memory for tpu_custom_call.1']
    #allocation5 [shape = 'u8[2048]{0}', space=vmem, size = 0x800, scoped, tag = 'output window, operand 0, single buffered']
    %7 = vsyncpa [#allocation3], 0
    %8 = vsyncpa [#allocation4], 0
    // Predicated region
    $region2: #{tpu_custom_call.1} parent=1 // pred_check
      _
    $region3: #{tpu_custom_call.1} parent=1 // pred_check_branch
      %10 = sbr.rel (0) target = $region5
    $region4: #{tpu_custom_call.1} parent=1 // pred_region
      %s12 = ssub.s32 64, 64
      %13 = vsyncadd [#allocation3], %s12
      %s15 = sshll.u32 [#allocation2], 4
      %s16 = int_to_ptr.vmem [resolvable:$true] %s15
      %18 = dma.hbm_to_vmem [thread:$0]  %s0, 64, %s16, [#allocation3]
    $region5: #{tpu_custom_call.1} parent=1 // pred_fallthru
      _
    // Predicated region
    $region6: #{tpu_custom_call.1} parent=1 // pred_check
      _
    $region7: #{tpu_custom_call.1} parent=1 // pred_check_branch
      %20 = sbr.rel (0) target = $region9
    $region8: #{tpu_custom_call.1} parent=1 // pred_region
      _
    $region9: #{tpu_custom_call.1} parent=1 // pred_fallthru
      _
    // Predicated region
    $region10: #{tpu_custom_call.1} parent=1 // pred_check
      _
    $region11: #{tpu_custom_call.1} parent=1 // pred_check_branch
      %22 = sbr.rel (0) target = $region13
    $region12: #{tpu_custom_call.1} parent=1 // pred_region
      %23 = dma.done [#allocation3], 64
    $region13: #{tpu_custom_call.1} parent=1 // pred_fallthru
      _
    %v24 = vld [vmem:[#allocation2] sm:$0xf]
    %v25 = vld [vmem:[%s1] sm:$0x1]
    %vm26 = vcmp.ge.f32.partialorder %v24, 0.0
    %v28 = vlaneseq
    %v29 = vshrl.u32 %v28, 7
    %v30 = vsub.s32 0, %v29
    %v31 = vrot.slane %v25, %v30
    %v33 = vmul.f32 %v24, %v31
    %v34 = vsel %vm26, %v24, %v33
    %35 = vst [vmem:[#allocation5] sm:$0xf] %v34
    // Predicated region
    $region14: #{tpu_custom_call.1} parent=1 // pred_check
      _
    $region15: #{tpu_custom_call.1} parent=1 // pred_check_branch
      %37 = sbr.rel (0) target = $region17
    $region16: #{tpu_custom_call.1} parent=1 // pred_region
      %s39 = ssub.s32 64, 64
      %40 = vsyncadd [#allocation4], %s39
      %s42 = sshll.u32 [#allocation5], 4
      %s43 = int_to_ptr.vmem [resolvable:$true] %s42
      %45 = dma.vmem_to_hbm [thread:$0]  %s43, 64, %s2, [#allocation4]
    $region17: #{tpu_custom_call.1} parent=1 // pred_fallthru
      _
    // Predicated region
    $region18: #{tpu_custom_call.1} parent=1 // pred_check
      _
    $region19: #{tpu_custom_call.1} parent=1 // pred_check_branch
      %47 = sbr.rel (0) target = $region21
    $region20: #{tpu_custom_call.1} parent=1 // pred_region
      %48 = dma.done [#allocation4], 64
    $region21: #{tpu_custom_call.1} parent=1 // pred_fallthru
      _
    %49 = vsyncpa [#allocation3], 1
    %50 = vsyncpa [#allocation4], 1

</llo_original>
